<compile_context>
chip_gen: v7x
topology: tpu7x:2x2x1
jax: 0.10.0
libtpu: 0.0.40
codegen_flags: <defaults>
</compile_context>

<pallas_src>
import functools

import jax
import jax.numpy as jnp
import numpy as np
from jax.experimental import pallas as pl
from jax.experimental.pallas import tpu as pltpu


# ---------------------------------------------------------------------------
# Tiling / compiler-parameter helpers
# ---------------------------------------------------------------------------
def _round_up(v, m):
    return -(-v // m) * m


def _tpu_vmem_capacity():
    """Physical VMEM bytes per TensorCore (conservative fallback: 64 MiB)."""
    try:
        return int(pltpu.get_tpu_info().vmem_capacity_bytes)
    except Exception:
        return 64 * 1024 * 1024


def _per_row_vmem_bytes(T, C, itemsize):
    """VMEM bytes one batch row of a block costs.

    Counts x-in + y-out (double-buffered, native dtype) plus ~3 live f32
    temporaries inside the kernel body (f32 cast of the tail, its squared
    deviation, and the f32 result before the store cast).
    """
    tpad = _round_up(max(T, 8), 8)      # sublane padding
    cpad = _round_up(max(C, 128), 128)  # lane padding
    return tpad * cpad * (4 * itemsize + 3 * 4)


def _choose_blocks(B, T, C, itemsize, vmem_cap):
    """Pick (bt, cb, grid_b, grid_c) for a native (B, T, C) layout."""
    per_row = _per_row_vmem_bytes(T, C, itemsize)
    # Leave headroom for compiler scratch / surrounding fusions, then take the
    # largest batch block that fits -- big tiles amortize the ~0.35 us/step
    # grid overhead (v5e/v6e have 128 MiB VMEM, v7x 64 MiB).
    budget = max(2 * 1024 * 1024, (vmem_cap - 16 * 1024 * 1024) // 2)
    bt = max(1, min(B, budget // per_row))
    if B >= 2:
        # keep >= 2 batch grid steps so both v7x TensorCores get work
        bt = min(bt, pl.cdiv(B, 2))
    grid_b = pl.cdiv(B, bt)             # ragged last block is fine (per-row op)

    # v7x: if the batch axis has a single step, split channels instead.
    cb = C
    if grid_b < 2 and C % 256 == 0:
        cb = C // 2                     # multiple of 128 by construction
    grid_c = pl.cdiv(C, cb)
    return bt, cb, grid_b, grid_c


def _vmem_limit_bytes(bt, T, cb, itemsize, vmem_cap):
    footprint = bt * _per_row_vmem_bytes(T, cb, itemsize)
    limit = int(footprint * 1.25) + 2 * 1024 * 1024
    limit = max(limit, 16 * 1024 * 1024)
    return min(limit, vmem_cap - 8 * 1024 * 1024)


def _compiler_params(bt, T, cb, itemsize, vmem_cap):
    return pltpu.CompilerParams(
        dimension_semantics=("parallel", "parallel"),
        vmem_limit_bytes=_vmem_limit_bytes(bt, T, cb, itemsize, vmem_cap),
    )


def _norm_cost(B, T, C, length, itemsize):
    return pl.CostEstimate(
        flops=int(B * C * (4 * length + 2 * T + 8)),
        transcendentals=int(2 * B * C),           # sqrt + reciprocal / channel
        bytes_accessed=int(2 * B * T * C * itemsize + 8 * B * C + 8 * C),
    )


def _denorm_cost(B, T, C, itemsize):
    return pl.CostEstimate(
        flops=int(B * C * (2 * T + 4)),
        transcendentals=int(B * C),               # reciprocal / channel
        bytes_accessed=int(2 * B * T * C * itemsize + 8 * B * C + 8 * C),
    )


# ---------------------------------------------------------------------------
# Kernels (native layout: x tile is (bt, T, cb); stats tile is (bt, 2, cb))
# ---------------------------------------------------------------------------
def _revin_norm_kernel(x_ref, w_ref, b_ref, y_ref, stats_ref,
                       *, length, eps, affine, subtract_last):
    x = x_ref[...]                                       # (bt, T, cb) native dtype
    T = x.shape[1]

    # ---- two-pass stats over the last `length` timesteps (f32) -----------
    tail = x[:, T - length:, :].astype(jnp.float32)      # static slice, (bt, L, cb)
    mean = jnp.mean(tail, axis=1, keepdims=True)         # (bt, 1, cb)
    diff = tail - mean
    var = jnp.mean(diff * diff, axis=1, keepdims=True)   # torch.var(unbiased=False)
    std = jnp.sqrt(var + eps)                            # (bt, 1, cb)

    if subtract_last:
        center = x[:, T - 1:T, :].astype(jnp.float32)    # last timestep
    else:
        center = mean

    stats_ref[:, 0:1, :] = center.astype(stats_ref.dtype)
    stats_ref[:, 1:2, :] = std.astype(stats_ref.dtype)

    # ---- fold ((x - center)/std)*w + b into x*scale + shift --------------
    inv_std = pl.reciprocal(std, approx=False)           # per-channel only
    if affine:
        w = w_ref[...].astype(jnp.float32)               # (1, 1, cb)
        b = b_ref[...].astype(jnp.float32)
        scale = w * inv_std
        shift = b - center * scale
    else:
        scale = inv_std
        shift = -center * scale

    y = x.astype(jnp.float32) * scale + shift            # f32 FMA, cast at store
    y_ref[...] = y.astype(y_ref.dtype)


def _revin_denorm_kernel(x_ref, center_ref, std_ref, w_ref, b_ref, y_ref,
                         *, eps, affine):
    std = std_ref[...].astype(jnp.float32)               # (bt, 1, cb)
    center = center_ref[...].astype(jnp.float32)

    # Fold ((x - b)/(w + eps^2))*std + center into x*scale + shift.
    if affine:
        denom = w_ref[...].astype(jnp.float32) + eps * eps
        scale = std * pl.reciprocal(denom, approx=False)
        shift = center - b_ref[...].astype(jnp.float32) * scale
    else:
        scale = std
        shift = center

    y = x_ref[...].astype(jnp.float32) * scale + shift
    y_ref[...] = y.astype(y_ref.dtype)


# ---------------------------------------------------------------------------
# Public wrappers (PyTorch (B, T, C) convention -- no layout change)
# ---------------------------------------------------------------------------
@functools.partial(jax.jit, static_argnames=(
    "length", "eps", "affine", "subtract_last"))
def revin_norm(x, weight, bias, *, length, eps=1e-5, affine=True,
               subtract_last=False):
    """RevIN mode='norm'. Returns (normalized_x, center, stdev); stats (B,1,C) f32."""
    B, T, C = x.shape
    if not (1 <= length <= T):
        raise ValueError(f"RevIN length={length} must satisfy 1 <= length <= T={T}")
    w = weight.reshape(1, 1, C).astype(jnp.float32)
    b = bias.reshape(1, 1, C).astype(jnp.float32)

    itemsize = x.dtype.itemsize
    vmem_cap = _tpu_vmem_capacity()
    bt, cb, grid_b, grid_c = _choose_blocks(B, T, C, itemsize, vmem_cap)

    kernel = functools.partial(
        _revin_norm_kernel, length=length, eps=eps, affine=affine,
        subtract_last=subtract_last)

    grid_spec = pltpu.PrefetchScalarGridSpec(
        num_scalar_prefetch=0,
        grid=(grid_b, grid_c),
        in_specs=[
            pl.BlockSpec((bt, T, cb), lambda i, j: (i, 0, j)),   # x
            pl.BlockSpec((1, 1, cb), lambda i, j: (0, 0, j)),    # affine weight
            pl.BlockSpec((1, 1, cb), lambda i, j: (0, 0, j)),    # affine bias
        ],
        out_specs=[
            pl.BlockSpec((bt, T, cb), lambda i, j: (i, 0, j)),   # normalized x
            pl.BlockSpec((bt, 2, cb), lambda i, j: (i, 0, j)),   # packed stats
        ],
    )
    y, stats = pl.pallas_call(
        kernel,
        out_shape=(
            jax.ShapeDtypeStruct((B, T, C), x.dtype),
            jax.ShapeDtypeStruct((B, 2, C), jnp.float32),
        ),
        grid_spec=grid_spec,
        compiler_params=_compiler_params(bt, T, cb, itemsize, vmem_cap),
        cost_estimate=_norm_cost(B, T, C, length, itemsize),
    )(x, w, b)
    # stats row 0 = center (mean or last), row 1 = stdev -- tiny slices.
    return y, stats[:, 0:1, :], stats[:, 1:2, :]


@functools.partial(jax.jit, static_argnames=("eps", "affine"))
def revin_denorm(x, center, stdev, weight, bias, *, eps=1e-5, affine=True):
    """RevIN mode='denorm' using the stats produced by revin_norm."""
    B, T, C = x.shape
    w = weight.reshape(1, 1, C).astype(jnp.float32)
    b = bias.reshape(1, 1, C).astype(jnp.float32)
    center = center.reshape(B, 1, C).astype(jnp.float32)
    stdev = stdev.reshape(B, 1, C).astype(jnp.float32)

    itemsize = x.dtype.itemsize
    vmem_cap = _tpu_vmem_capacity()
    bt, cb, grid_b, grid_c = _choose_blocks(B, T, C, itemsize, vmem_cap)

    kernel = functools.partial(_revin_denorm_kernel, eps=eps, affine=affine)

    grid_spec = pltpu.PrefetchScalarGridSpec(
        num_scalar_prefetch=0,
        grid=(grid_b, grid_c),
        in_specs=[
            pl.BlockSpec((bt, T, cb), lambda i, j: (i, 0, j)),   # normalized x
            pl.BlockSpec((bt, 1, cb), lambda i, j: (i, 0, j)),   # center
            pl.BlockSpec((bt, 1, cb), lambda i, j: (i, 0, j)),   # stdev
            pl.BlockSpec((1, 1, cb), lambda i, j: (0, 0, j)),    # affine weight
            pl.BlockSpec((1, 1, cb), lambda i, j: (0, 0, j)),    # affine bias
        ],
        out_specs=pl.BlockSpec((bt, T, cb), lambda i, j: (i, 0, j)),
    )
    return pl.pallas_call(
        kernel,
        out_shape=jax.ShapeDtypeStruct((B, T, C), x.dtype),
        grid_spec=grid_spec,
        compiler_params=_compiler_params(bt, T, cb, itemsize, vmem_cap),
        cost_estimate=_denorm_cost(B, T, C, itemsize),
    )(x, center, stdev, w, b)


# ---------------------------------------------------------------------------
# Pure-JAX reference (mirrors the PyTorch module exactly)
# ---------------------------------------------------------------------------
def _ref_norm(x, w, b, *, length, eps, affine, subtract_last):
    xf = x.astype(jnp.float32)
    tail = xf[:, -length:, :]
    mean = jnp.mean(tail, axis=1, keepdims=True)
    var = jnp.mean((tail - mean) ** 2, axis=1, keepdims=True)   # unbiased=False
    std = jnp.sqrt(var + eps)
    center = xf[:, -1:, :] if subtract_last else mean
    y = (xf - center) / std
    if affine:
        y = y * w.reshape(1, 1, -1) + b.reshape(1, 1, -1)
    return y.astype(x.dtype), center, std


def _ref_denorm(x, center, std, w, b, *, eps, affine):
    xf = x.astype(jnp.float32)
    if affine:
        xf = (xf - b.reshape(1, 1, -1)) / (w.reshape(1, 1, -1) + eps * eps)
    return (xf * std + center).astype(x.dtype)


# ---------------------------------------------------------------------------
# Self-test
# ---------------------------------------------------------------------------
if __name__ == "__main__":
    EPS = 1e-5
    key = jax.random.PRNGKey(0)

    # (B, T, C, length, dtype, rtol/atol) -- includes a ragged batch (B=3),
    # a length that is not a sublane multiple, and a bf16 case.
    shape_cases = [
        (4, 128, 8, 64, jnp.float32, 1e-4),
        (3, 96, 12, 50, jnp.float32, 1e-4),
        (2, 64, 8, 64, jnp.bfloat16, 2e-2),
    ]

    for (B, T, C, LENGTH, dtype, tol) in shape_cases:
        key, k1 = jax.random.split(key)
        x = (jax.random.normal(k1, (B, T, C), dtype=jnp.float32) * 2.0
             + 3.0).astype(dtype)

        # Non-trivial affine params plus RevIN default init (ones / zeros).
        w_nt = 1.0 + 0.05 * jnp.arange(C, dtype=jnp.float32)
        b_nt = 0.02 * jnp.arange(C, dtype=jnp.float32) - 0.05
        w_id = jnp.ones((C,), dtype=jnp.float32)
        b_id = jnp.zeros((C,), dtype=jnp.float32)

        configs = [
            dict(affine=True, subtract_last=False, w=w_nt, b=b_nt),
            dict(affine=True, subtract_last=True, w=w_nt, b=b_nt),
            dict(affine=False, subtract_last=False, w=w_id, b=b_id),
        ]

        for cfg in configs:
            affine, sub_last = cfg["affine"], cfg["subtract_last"]
            w, b = cfg["w"], cfg["b"]

            # mode == 'norm'
            y, center, stdev = revin_norm(
                x, w, b, length=LENGTH, eps=EPS, affine=affine,
                subtract_last=sub_last)
            y = jax.block_until_ready(y)

            # mode == 'denorm'
            x_rec = revin_denorm(y, center, stdev, w, b, eps=EPS, affine=affine)
            x_rec = jax.block_until_ready(x_rec)

            # Reference
            y_ref, c_ref, s_ref = _ref_norm(
                x, w, b, length=LENGTH, eps=EPS, affine=affine,
                subtract_last=sub_last)
            xr_ref = _ref_denorm(y_ref, c_ref, s_ref, w, b, eps=EPS,
                                 affine=affine)

            np.testing.assert_allclose(
                np.asarray(y, dtype=np.float32),
                np.asarray(y_ref, dtype=np.float32), rtol=tol, atol=tol)
            np.testing.assert_allclose(
                np.asarray(center), np.asarray(c_ref), rtol=tol, atol=tol)
            np.testing.assert_allclose(
                np.asarray(stdev), np.asarray(s_ref), rtol=tol, atol=tol)
            np.testing.assert_allclose(
                np.asarray(x_rec, dtype=np.float32),
                np.asarray(xr_ref, dtype=np.float32), rtol=tol, atol=tol)

    print("KERNEL_OK")
</pallas_src>

<mosaic_0001>
module attributes {stable_mosaic.version = 11 : i64} {
  func.func @_revin_norm_kernel(%arg0: i32, %arg1: i32, %arg2: memref<2x128x8xf32, #tpu.memory_space<vmem>>, %arg3: memref<1x1x8xf32, #tpu.memory_space<vmem>>, %arg4: memref<1x1x8xf32, #tpu.memory_space<vmem>>, %arg5: memref<2x128x8xf32, #tpu.memory_space<vmem>>, %arg6: memref<2x2x8xf32, #tpu.memory_space<vmem>>) attributes {dimension_semantics = [#tpu.dimension_semantics<parallel>, #tpu.dimension_semantics<parallel>], iteration_bounds = array<i64: 2, 1>, scalar_prefetch = 0 : i64, scratch_operands = 0 : i64, tpu.core_type = #tpu.core_type<tc>, window_params = [{transform_indices = @transform_0, window_bounds = array<i64: 2, 128, 8>}, {transform_indices = @transform_1, window_bounds = array<i64: 1, 1, 8>}, {transform_indices = @transform_2, window_bounds = array<i64: 1, 1, 8>}, {transform_indices = @transform_3, window_bounds = array<i64: 2, 128, 8>}, {transform_indices = @transform_4, window_bounds = array<i64: 2, 2, 8>}]} {
    %c0 = arith.constant 0 : index
    %c0_0 = arith.constant 0 : index
    %c0_1 = arith.constant 0 : index
    %0 = vector.load %arg2[%c0, %c0_0, %c0_1] : memref<2x128x8xf32, #tpu.memory_space<vmem>>, vector<2x128x8xf32>
    %1 = vector.extract_strided_slice %0 {offsets = [0, 64, 0], sizes = [2, 64, 8], strides = [1, 1, 1]} : vector<2x128x8xf32> to vector<2x64x8xf32>
    %cst = arith.constant dense<0.000000e+00> : vector<2x8xf32>
    %2 = vector.multi_reduction <add>, %1, %cst [1] : vector<2x64x8xf32> to vector<2x8xf32>
    %3 = vector.shape_cast %2 : vector<2x8xf32> to vector<2x1x8xf32>
    %cst_2 = arith.constant 6.400000e+01 : f32
    %4 = vector.broadcast %cst_2 : f32 to vector<2x1x8xf32>
    %5 = arith.divf %3, %4 : vector<2x1x8xf32>
    %6 = vector.broadcast %5 : vector<2x1x8xf32> to vector<2x64x8xf32>
    %7 = arith.subf %1, %6 : vector<2x64x8xf32>
    %8 = arith.mulf %7, %7 : vector<2x64x8xf32>
    %cst_3 = arith.constant dense<0.000000e+00> : vector<2x8xf32>
    %9 = vector.multi_reduction <add>, %8, %cst_3 [1] : vector<2x64x8xf32> to vector<2x8xf32>
    %10 = vector.shape_cast %9 : vector<2x8xf32> to vector<2x1x8xf32>
    %cst_4 = arith.constant 6.400000e+01 : f32
    %11 = vector.broadcast %cst_4 : f32 to vector<2x1x8xf32>
    %12 = arith.divf %10, %11 : vector<2x1x8xf32>
    %cst_5 = arith.constant 9.99999974E-6 : f32
    %13 = vector.broadcast %cst_5 : f32 to vector<2x1x8xf32>
    %14 = arith.addf %12, %13 : vector<2x1x8xf32>
    %15 = math.sqrt %14 : vector<2x1x8xf32>
    %c0_6 = arith.constant 0 : index
    %c0_7 = arith.constant 0 : index
    %c0_8 = arith.constant 0 : index
    %16 = vector.load %arg6[%c0_6, %c0_7, %c0_8] : memref<2x2x8xf32, #tpu.memory_space<vmem>>, vector<2x1x8xf32>
    tpu.vector_store %arg6[%c0_6, %c0_7, %c0_8], %5 {strides = array<i32>} : memref<2x2x8xf32, #tpu.memory_space<vmem>>, vector<2x1x8xf32>,
    %c0_9 = arith.constant 0 : index
    %c1 = arith.constant 1 : index
    %c0_10 = arith.constant 0 : index
    %17 = vector.load %arg6[%c0_9, %c1, %c0_10] : memref<2x2x8xf32, #tpu.memory_space<vmem>>, vector<2x1x8xf32>
    tpu.vector_store %arg6[%c0_9, %c1, %c0_10], %15 {strides = array<i32>} : memref<2x2x8xf32, #tpu.memory_space<vmem>>, vector<2x1x8xf32>,
    %18 = tpu.reciprocal %15 : vector<2x1x8xf32> -> vector<2x1x8xf32>
    %c0_11 = arith.constant 0 : index
    %c0_12 = arith.constant 0 : index
    %c0_13 = arith.constant 0 : index
    %19 = vector.load %arg3[%c0_11, %c0_12, %c0_13] : memref<1x1x8xf32, #tpu.memory_space<vmem>>, vector<1x1x8xf32>
    %c0_14 = arith.constant 0 : index
    %c0_15 = arith.constant 0 : index
    %c0_16 = arith.constant 0 : index
    %20 = vector.load %arg4[%c0_14, %c0_15, %c0_16] : memref<1x1x8xf32, #tpu.memory_space<vmem>>, vector<1x1x8xf32>
    %21 = vector.broadcast %19 : vector<1x1x8xf32> to vector<2x1x8xf32>
    %22 = arith.mulf %21, %18 : vector<2x1x8xf32>
    %23 = arith.mulf %5, %22 : vector<2x1x8xf32>
    %24 = vector.broadcast %20 : vector<1x1x8xf32> to vector<2x1x8xf32>
    %25 = arith.subf %24, %23 : vector<2x1x8xf32>
    %26 = vector.broadcast %22 : vector<2x1x8xf32> to vector<2x128x8xf32>
    %27 = arith.mulf %0, %26 : vector<2x128x8xf32>
    %28 = vector.broadcast %25 : vector<2x1x8xf32> to vector<2x128x8xf32>
    %29 = arith.addf %27, %28 : vector<2x128x8xf32>
    %c0_17 = arith.constant 0 : index
    %c0_18 = arith.constant 0 : index
    %c0_19 = arith.constant 0 : index
    %30 = vector.load %arg5[%c0_17, %c0_18, %c0_19] : memref<2x128x8xf32, #tpu.memory_space<vmem>>, vector<2x128x8xf32>
    tpu.vector_store %arg5[%c0_17, %c0_18, %c0_19], %29 {strides = array<i32>} : memref<2x128x8xf32, #tpu.memory_space<vmem>>, vector<2x128x8xf32>,
    return
  }
  func.func @transform_0(%arg0: i32, %arg1: i32) -> (i32, i32, i32) {
    %c0_i32 = arith.constant 0 : i32
    %c0_i32_0 = arith.constant 0 : i32
    return %arg0, %c0_i32, %arg1 : i32, i32, i32
  }
  func.func @transform_1(%arg0: i32, %arg1: i32) -> (i32, i32, i32) {
    %c0_i32 = arith.constant 0 : i32
    %c0_i32_0 = arith.constant 0 : i32
    %c0_i32_1 = arith.constant 0 : i32
    return %c0_i32, %c0_i32_0, %arg1 : i32, i32, i32
  }
  func.func @transform_2(%arg0: i32, %arg1: i32) -> (i32, i32, i32) {
    %c0_i32 = arith.constant 0 : i32
    %c0_i32_0 = arith.constant 0 : i32
    %c0_i32_1 = arith.constant 0 : i32
    return %c0_i32, %c0_i32_0, %arg1 : i32, i32, i32
  }
  func.func @transform_3(%arg0: i32, %arg1: i32) -> (i32, i32, i32) {
    %c0_i32 = arith.constant 0 : i32
    %c0_i32_0 = arith.constant 0 : i32
    return %arg0, %c0_i32, %arg1 : i32, i32, i32
  }
  func.func @transform_4(%arg0: i32, %arg1: i32) -> (i32, i32, i32) {
    %c0_i32 = arith.constant 0 : i32
    %c0_i32_0 = arith.constant 0 : i32
    return %arg0, %c0_i32, %arg1 : i32, i32, i32
  }
}

</mosaic_0001>

<llo_original>
// kernel: revin_norm.1
$region0: #{revin_norm.1}
  #allocation0 [shape = 'u32[]', space=smem, size = 0x4, offset = 0x4, fixed_abs, tag = 'smem constant byte address 0x4 - core index']
  #allocation1 [shape = 'u32[144,128]{1,0:T(1,128)}', space=vmem, size = 0x12000, scoped, tag = 'internal scratch']
  %s0 = inlined_call_operand.vmem [shape: f32[4,128,8], index: 0, kind: input, shape index: {}]
  %s1 = inlined_call_operand.vmem [shape: f32[1,1,8], index: 1, kind: input, shape index: {}]
  %s2 = inlined_call_operand.vmem [shape: f32[1,1,8], index: 2, kind: input, shape index: {}]
  %s3 = inlined_call_operand.vmem [shape: f32[4,128,8], index: 3, kind: output, shape index: {0}]
  %s4 = inlined_call_operand.vmem [shape: f32[4,2,8], index: 4, kind: output, shape index: {1}]
  %5 = xla_tuple %s3, %s4
  %s6 = sld [smem:[#allocation0]]
  $region53: #{revin_norm.1} parent=0
    _
  %s8 = ssub.s32 1, %s6
  %s9 = scalar_select 0, %s8, %s6
  loop: start=0, step=1, limit=4
  $region2: #{revin_norm.1} parent=0 // loop_pre_header
    _
  $region3: #{revin_norm.1} parent=0 // loop_header
    %s11 = sphi 0, %s15
    %p12 = scmp.ge.s32.totalorder %s11, 4
    %s18 = sphi 0, %s30
    %s19 = sphi 0, %s26
    %s20 = sphi 0, %s18
    %s21 = sphi 0, %s19
    %s22 = sphi 0, %s20
    %s23 = sphi 0, %s21
    %s35 = sphi 0, %s37
    %s38 = sphi 0, %s35
    %s39 = sphi 0, %s38
    %s55 = sphi 0, %s39
    %s61 = sphi 0, %s63
    %s64 = sphi 0, %s61
    %s65 = sphi 0, %s64
    %s81 = sphi 0, %s65
    %s87 = sphi 0, %s89
    %s90 = sphi 0, %s87
    %s91 = sphi 0, %s90
    %s107 = sphi 0, %s91
    %s115 = sphi 0, %s117
    %s118 = sphi 0, %s115
    %s119 = sphi 0, %s118
    %s135 = sphi 0, %s119
    %s143 = sphi 0, %s145
    %s146 = sphi 0, %s143
    %s147 = sphi 0, %s146
    %s163 = sphi 0, %s147
  $region4: #{revin_norm.1} parent=0 // loop_header_branch
    %14 = sbr.rel (%p12) target = $region8
  $region5: #{revin_norm.1} parent=0 // loop_body
    %s16 = ssub.s32 %s11, 1
    %s17 = ssub.s32 %s11, 2
    %s24 = sadd.s32 1, %s19
    %p25 = scmp.ge.s32.totalorder %s24, 1
    %s26 = scalar_select %p25, 0, %s24
    %s27 = sadd.s32 1, %s18
    %s28 = scalar_select %p25, %s27, %s18
    %p29 = scmp.ge.s32.totalorder %s28, 2
    %s30 = scalar_select %p29, 0, %s28
    %s31 = ssub.s32 %s18, %s30
    %s32 = ssub.s32 %s19, %s26
    %s33 = sor.u32 %s31, %s32
    %p34 = scmp.eq.s32.totalorder %s33, 0
    %s36 = sadd.s32 %s35, 1
    %s37 = scalar_select %p34, %s35, %s36
    %p40 = pneg %p34
    %p41 = scmp.eq.s32.totalorder %s11, 1
    %p42 = por %p40, %p41
    %p43 = scmp.ne.s32.totalorder %s35, %s38
    %p44 = scmp.eq.s32.totalorder %s11, 0
    %p45 = por %p43, %p44
    %p46 = scmp.ne.s32.totalorder %s35, %s38
    %p47 = scmp.eq.s32.totalorder %s16, 1
    %p48 = por %p46, %p47
    %p49 = scmp.ne.s32.totalorder %s38, %s39
    %p50 = scmp.eq.s32.totalorder %s16, 0
    %p51 = por %p49, %p50
    %p52 = scmp.ne.s32.totalorder %s38, %s39
    %p53 = scmp.eq.s32.totalorder %s17, 1
    %p54 = por %p52, %p53
    %p56 = scmp.ne.s32.totalorder %s39, %s55
    %p57 = scmp.eq.s32.totalorder %s17, 0
    %p58 = por %p56, %p57
    %s59 = ssub.s32 %s19, %s26
    %p60 = scmp.eq.s32.totalorder %s59, 0
    %s62 = sadd.s32 %s61, 1
    %s63 = scalar_select %p60, %s61, %s62
    %p66 = pneg %p60
    %p67 = scmp.eq.s32.totalorder %s11, 1
    %p68 = por %p66, %p67
    %p69 = scmp.ne.s32.totalorder %s61, %s64
    %p70 = scmp.eq.s32.totalorder %s11, 0
    %p71 = por %p69, %p70
    %p72 = scmp.ne.s32.totalorder %s61, %s64
    %p73 = scmp.eq.s32.totalorder %s16, 1
    %p74 = por %p72, %p73
    %p75 = scmp.ne.s32.totalorder %s64, %s65
    %p76 = scmp.eq.s32.totalorder %s16, 0
    %p77 = por %p75, %p76
    %p78 = scmp.ne.s32.totalorder %s64, %s65
    %p79 = scmp.eq.s32.totalorder %s17, 1
    %p80 = por %p78, %p79
    %p82 = scmp.ne.s32.totalorder %s65, %s81
    %p83 = scmp.eq.s32.totalorder %s17, 0
    %p84 = por %p82, %p83
    %s85 = ssub.s32 %s19, %s26
    %p86 = scmp.eq.s32.totalorder %s85, 0
    %s88 = sadd.s32 %s87, 1
    %s89 = scalar_select %p86, %s87, %s88
    %p92 = pneg %p86
    %p93 = scmp.eq.s32.totalorder %s11, 1
    %p94 = por %p92, %p93
    %p95 = scmp.ne.s32.totalorder %s87, %s90
    %p96 = scmp.eq.s32.totalorder %s11, 0
    %p97 = por %p95, %p96
    %p98 = scmp.ne.s32.totalorder %s87, %s90
    %p99 = scmp.eq.s32.totalorder %s16, 1
    %p100 = por %p98, %p99
    %p101 = scmp.ne.s32.totalorder %s90, %s91
    %p102 = scmp.eq.s32.totalorder %s16, 0
    %p103 = por %p101, %p102
    %p104 = scmp.ne.s32.totalorder %s90, %s91
    %p105 = scmp.eq.s32.totalorder %s17, 1
    %p106 = por %p104, %p105
    %p108 = scmp.ne.s32.totalorder %s91, %s107
    %p109 = scmp.eq.s32.totalorder %s17, 0
    %p110 = por %p108, %p109
    %s111 = ssub.s32 %s18, %s30
    %s112 = ssub.s32 %s19, %s26
    %s113 = sor.u32 %s111, %s112
    %p114 = scmp.eq.s32.totalorder %s113, 0
    %s116 = sadd.s32 %s115, 1
    %s117 = scalar_select %p114, %s115, %s116
    %p120 = pneg %p114
    %p121 = scmp.eq.s32.totalorder %s11, 1
    %p122 = por %p120, %p121
    %p123 = scmp.ne.s32.totalorder %s115, %s118
    %p124 = scmp.eq.s32.totalorder %s11, 0
    %p125 = por %p123, %p124
    %p126 = scmp.ne.s32.totalorder %s115, %s118
    %p127 = scmp.eq.s32.totalorder %s16, 1
    %p128 = por %p126, %p127
    %p129 = scmp.ne.s32.totalorder %s118, %s119
    %p130 = scmp.eq.s32.totalorder %s16, 0
    %p131 = por %p129, %p130
    %p132 = scmp.ne.s32.totalorder %s118, %s119
    %p133 = scmp.eq.s32.totalorder %s17, 1
    %p134 = por %p132, %p133
    %p136 = scmp.ne.s32.totalorder %s119, %s135
    %p137 = scmp.eq.s32.totalorder %s17, 0
    %p138 = por %p136, %p137
    %s139 = ssub.s32 %s18, %s30
    %s140 = ssub.s32 %s19, %s26
    %s141 = sor.u32 %s139, %s140
    %p142 = scmp.eq.s32.totalorder %s141, 0
    %s144 = sadd.s32 %s143, 1
    %s145 = scalar_select %p142, %s143, %s144
    %p148 = pneg %p142
    %p149 = scmp.eq.s32.totalorder %s11, 1
    %p150 = por %p148, %p149
    %p151 = scmp.ne.s32.totalorder %s143, %s146
    %p152 = scmp.eq.s32.totalorder %s11, 0
    %p153 = por %p151, %p152
    %p154 = scmp.ne.s32.totalorder %s143, %s146
    %p155 = scmp.eq.s32.totalorder %s16, 1
    %p156 = por %p154, %p155
    %p157 = scmp.ne.s32.totalorder %s146, %s147
    %p158 = scmp.eq.s32.totalorder %s16, 0
    %p159 = por %p157, %p158
    %p160 = scmp.ne.s32.totalorder %s146, %s147
    %p161 = scmp.eq.s32.totalorder %s17, 1
    %p162 = por %p160, %p161
    %p164 = scmp.ne.s32.totalorder %s147, %s163
    %p165 = scmp.eq.s32.totalorder %s17, 0
    %p166 = por %p164, %p165
    %p167 = scmp.le.s32.totalorder 1, %s11
    %p168 = scmp.lt.s32.totalorder %s11, 3
    %p169 = pnand %p167, %p168
    %p170 = pneg %p169
    // Predicated region
    $region9: #{revin_norm.1} parent=5 // pred_check
      _
    $region10: #{revin_norm.1} parent=5 // pred_check_branch
      %172 = sbr.rel (%p169) target = $region12
    $region11: #{revin_norm.1} parent=5 // pred_region
      %s173 = ssub.s32 %s11, 1
      // Predicated region
      $region13: #{revin_norm.1} parent=11 // pred_check
        %p174 = pneg %p77
      $region14: #{revin_norm.1} parent=11 // pred_check_branch
        %176 = sbr.rel (%p174) target = $region16
      $region15: #{revin_norm.1} parent=11 // pred_region
        %p177 = scmp.lt.s32.totalorder %s21, 0
        %s178 = scalar_select %p177, %s21, 0
        %s179 = scalar_lea.vmem %s1, %s178
      $region16: #{revin_norm.1} parent=11 // pred_fallthru
        _
      // Predicated region
      $region17: #{revin_norm.1} parent=11 // pred_check
        %p180 = pneg %p103
      $region18: #{revin_norm.1} parent=11 // pred_check_branch
        %182 = sbr.rel (%p180) target = $region20
      $region19: #{revin_norm.1} parent=11 // pred_region
        %p183 = scmp.lt.s32.totalorder %s21, 0
        %s184 = scalar_select %p183, %s21, 0
        %s185 = scalar_lea.vmem %s2, %s184
      $region20: #{revin_norm.1} parent=11 // pred_fallthru
        _
    $region12: #{revin_norm.1} parent=5 // pred_fallthru
      _
    %p186 = scmp.lt.s32.totalorder %s11, 2
    // Predicated region
    $region21: #{revin_norm.1} parent=5 // pred_check
      %p187 = pneg %p186
    $region22: #{revin_norm.1} parent=5 // pred_check_branch
      %189 = sbr.rel (%p187) target = $region24
    $region23: #{revin_norm.1} parent=5 // pred_region
      // Predicated region
      $region25: #{revin_norm.1} parent=23 // pred_check
        %p190 = pneg %p45
      $region26: #{revin_norm.1} parent=23 // pred_check_branch
        %192 = sbr.rel (%p190) target = $region28
      $region27: #{revin_norm.1} parent=23 // pred_region
        %s193 = smul.u32 2, %s18
        %p194 = scmp.lt.s32.totalorder %s193, 3
        %s195 = scalar_select %p194, %s193, 3
        %p196 = scmp.lt.s32.totalorder %s19, 0
        %s197 = scalar_select %p196, %s19, 0
        %s198 = smul.addr %s195, 16
        %s199 = sadd.s32 %s197, %s198
        %s200 = smul.addr %s199, 8
        %s201 = scalar_lea.vmem %s0, %s200
        %s202 = smul.u32 2, %s18
      $region28: #{revin_norm.1} parent=23 // pred_fallthru
        _
    $region24: #{revin_norm.1} parent=5 // pred_fallthru
      _
    %p203 = scmp.le.s32.totalorder 1, %s11
    %p204 = scmp.lt.s32.totalorder %s11, 3
    %p205 = pnand %p203, %p204
    %p206 = pneg %p205
    // Predicated region
    $region29: #{revin_norm.1} parent=5 // pred_check
      _
    $region30: #{revin_norm.1} parent=5 // pred_check_branch
      %208 = sbr.rel (%p205) target = $region32
    $region31: #{revin_norm.1} parent=5 // pred_region
      %s209 = ssub.s32 %s11, 1
      %s210 = smul.u32 2, %s20
      %p211 = scmp.lt.s32.totalorder %s210, 3
      %s212 = scalar_select %p211, %s210, 3
      %p213 = scmp.lt.s32.totalorder %s21, 0
      %s214 = scalar_select %p213, %s21, 0
      %s215 = smul.addr %s212, 16
      %s216 = sadd.s32 %s214, %s215
      %s217 = smul.addr %s216, 8
      %s218 = scalar_lea.vmem %s0, %s217
      %p219 = pneg %p51
      %p220 = pneg %p48
      %p221 = scmp.lt.s32.totalorder %s21, 0
      %s222 = scalar_select %p221, %s21, 0
      %s223 = scalar_lea.vmem %s1, %s222
      %p224 = pneg %p77
      %p225 = pneg %p74
      %p226 = scmp.lt.s32.totalorder %s21, 0
      %s227 = scalar_select %p226, %s21, 0
      %s228 = scalar_lea.vmem %s2, %s227
      %p229 = pneg %p103
      %p230 = pneg %p100
      %p231 = pneg %p131
      %p232 = pneg %p128
      %s233 = smul.u32 2, %s20
      %p234 = scmp.lt.s32.totalorder %s233, 3
      %s235 = scalar_select %p234, %s233, 3
      %p236 = scmp.lt.s32.totalorder %s21, 0
      %s237 = scalar_select %p236, %s21, 0
      %s238 = smul.addr %s235, 16
      %s239 = sadd.s32 %s237, %s238
      %s240 = smul.addr %s239, 8
      %s241 = scalar_lea.vmem %s3, %s240
      %p242 = pneg %p159
      %p243 = pneg %p156
      %s244 = smul.u32 2, %s20
      %p245 = scmp.lt.s32.totalorder %s244, 3
      %s246 = scalar_select %p245, %s244, 3
      %p247 = scmp.lt.s32.totalorder %s21, 0
      %s248 = scalar_select %p247, %s21, 0
      %s249 = sadd.s32 %s248, %s246
      %s250 = smul.addr %s249, 2
      %s251 = scalar_lea.vmem %s4, %s250
      %s252 = smul.u32 2, %s20
      %p253 = scmp.lt.s32.totalorder %s252, 3
      %s254 = scalar_select %p253, %s252, 3
      %p255 = scmp.lt.s32.totalorder %s21, 0
      %s256 = scalar_select %p255, %s21, 0
      %s257 = smul.addr %s254, 16
      %s258 = sadd.s32 %s256, %s257
      %s259 = smul.addr %s258, 8
      %s260 = scalar_lea.vmem %s0, %s259
      %s261 = smul.u32 2, %s20
      %p262 = scmp.lt.s32.totalorder %s21, 0
      %s263 = scalar_select %p262, %s21, 0
      %s264 = scalar_lea.vmem %s1, %s263
      %p265 = scmp.lt.s32.totalorder %s21, 0
      %s266 = scalar_select %p265, %s21, 0
      %s267 = scalar_lea.vmem %s2, %s266
      %s268 = smul.u32 2, %s20
      %p269 = scmp.lt.s32.totalorder %s268, 3
      %s270 = scalar_select %p269, %s268, 3
      %p271 = scmp.lt.s32.totalorder %s21, 0
      %s272 = scalar_select %p271, %s21, 0
      %s273 = smul.addr %s270, 16
      %s274 = sadd.s32 %s272, %s273
      %s275 = smul.addr %s274, 8
      %s276 = scalar_lea.vmem %s3, %s275
      %s277 = smul.u32 2, %s20
      %s278 = smul.u32 2, %s20
      %p279 = scmp.lt.s32.totalorder %s278, 3
      %s280 = scalar_select %p279, %s278, 3
      %p281 = scmp.lt.s32.totalorder %s21, 0
      %s282 = scalar_select %p281, %s21, 0
      %s283 = sadd.s32 %s282, %s280
      %s284 = smul.addr %s283, 2
      %s285 = scalar_lea.vmem %s4, %s284
      %s286 = smul.u32 2, %s20
      %v287 = vld [vmem:[%s260] sm:$0xff]
      %v288 = vld [vmem:[%s260 + $0x8] sm:$0xff]
      %v289 = vld [vmem:[%s260 + $0x10] sm:$0xff]
      %v290 = vld [vmem:[%s260 + $0x18] sm:$0xff]
      %v291 = vld [vmem:[%s260 + $0x20] sm:$0xff]
      %v292 = vld [vmem:[%s260 + $0x28] sm:$0xff]
      %v293 = vld [vmem:[%s260 + $0x30] sm:$0xff]
      %v294 = vld [vmem:[%s260 + $0x38] sm:$0xff]
      %v295 = vld [vmem:[%s260 + $0x40] sm:$0xff]
      %v296 = vld [vmem:[%s260 + $0x48] sm:$0xff]
      %v297 = vld [vmem:[%s260 + $0x50] sm:$0xff]
      %v298 = vld [vmem:[%s260 + $0x58] sm:$0xff]
      %v299 = vld [vmem:[%s260 + $0x60] sm:$0xff]
      %v300 = vld [vmem:[%s260 + $0x68] sm:$0xff]
      %v301 = vld [vmem:[%s260 + $0x70] sm:$0xff]
      %v302 = vld [vmem:[%s260 + $0x78] sm:$0xff]
      %v303 = vld [vmem:[%s260 + $0x80] sm:$0xff]
      %v304 = vld [vmem:[%s260 + $0x88] sm:$0xff]
      %v305 = vld [vmem:[%s260 + $0x90] sm:$0xff]
      %v306 = vld [vmem:[%s260 + $0x98] sm:$0xff]
      %v307 = vld [vmem:[%s260 + $0xa0] sm:$0xff]
      %v308 = vld [vmem:[%s260 + $0xa8] sm:$0xff]
      %v309 = vld [vmem:[%s260 + $0xb0] sm:$0xff]
      %v310 = vld [vmem:[%s260 + $0xb8] sm:$0xff]
      %v311 = vld [vmem:[%s260 + $0xc0] sm:$0xff]
      %v312 = vld [vmem:[%s260 + $0xc8] sm:$0xff]
      %v313 = vld [vmem:[%s260 + $0xd0] sm:$0xff]
      %v314 = vld [vmem:[%s260 + $0xd8] sm:$0xff]
      %v315 = vld [vmem:[%s260 + $0xe0] sm:$0xff]
      %v316 = vld [vmem:[%s260 + $0xe8] sm:$0xff]
      %v317 = vld [vmem:[%s260 + $0xf0] sm:$0xff]
      %v318 = vld [vmem:[%s260 + $0xf8] sm:$0xff]
      %vm319 = vcmask 64512
      %v320 = vsel %vm319, %v295, 0.0
      %v321 = vsel %vm319, %v296, 0.0
      %v322 = vadd.f32 %v320, %v321
      %v323 = vsel %vm319, %v297, 0.0
      %v324 = vadd.f32 %v322, %v323
      %v325 = vsel %vm319, %v298, 0.0
      %v326 = vadd.f32 %v324, %v325
      %v327 = vsel %vm319, %v299, 0.0
      %v328 = vadd.f32 %v326, %v327
      %v329 = vsel %vm319, %v300, 0.0
      %v330 = vadd.f32 %v328, %v329
      %v331 = vsel %vm319, %v301, 0.0
      %v332 = vadd.f32 %v330, %v331
      %v333 = vsel %vm319, %v302, 0.0
      %v334 = vadd.f32 %v332, %v333
      %v335 = vrot.slane %v334, 4
      %v336 = vadd.f32 %v334, %v335
      %v337 = vrot.slane %v336, 2
      %v338 = vadd.f32 %v336, %v337
      %v339 = vrot.slane %v338, 1
      %v340 = vadd.f32 %v338, %v339
      %v341 = vsel %vm319, %v311, 0.0
      %v342 = vsel %vm319, %v312, 0.0
      %v343 = vadd.f32 %v341, %v342
      %v344 = vsel %vm319, %v313, 0.0
      %v345 = vadd.f32 %v343, %v344
      %v346 = vsel %vm319, %v314, 0.0
      %v347 = vadd.f32 %v345, %v346
      %v348 = vsel %vm319, %v315, 0.0
      %v349 = vadd.f32 %v347, %v348
      %v350 = vsel %vm319, %v316, 0.0
      %v351 = vadd.f32 %v349, %v350
      %v352 = vsel %vm319, %v317, 0.0
      %v353 = vadd.f32 %v351, %v352
      %v354 = vsel %vm319, %v318, 0.0
      %v355 = vadd.f32 %v353, %v354
      %v356 = vrot.slane %v355, 4
      %v357 = vadd.f32 %v355, %v356
      %v358 = vrot.slane %v357, 2
      %v359 = vadd.f32 %v357, %v358
      %v360 = vrot.slane %v359, 1
      %v361 = vadd.f32 %v359, %v360
      %v362 = vrcp.pop 64.0
      %v363 = vmul.f32 %v340, %v362
      %v364 = vmul.f32 %v361, %v362
      %v365 = vsub.f32 %v295, %v363
      %v366 = vsub.f32 %v296, %v363
      %v367 = vsub.f32 %v297, %v363
      %v368 = vsub.f32 %v298, %v363
      %v369 = vsub.f32 %v299, %v363
      %v370 = vsub.f32 %v300, %v363
      %v371 = vsub.f32 %v301, %v363
      %v372 = vsub.f32 %v302, %v363
      %v373 = vsub.f32 %v311, %v364
      %v374 = vsub.f32 %v312, %v364
      %v375 = vsub.f32 %v313, %v364
      %v376 = vsub.f32 %v314, %v364
      %v377 = vsub.f32 %v315, %v364
      %v378 = vsub.f32 %v316, %v364
      %v379 = vsub.f32 %v317, %v364
      %v380 = vsub.f32 %v318, %v364
      %v381 = vmul.f32 %v365, %v365
      %v382 = vmul.f32 %v366, %v366
      %v383 = vmul.f32 %v367, %v367
      %v384 = vmul.f32 %v368, %v368
      %v385 = vmul.f32 %v369, %v369
      %v386 = vmul.f32 %v370, %v370
      %v387 = vmul.f32 %v371, %v371
      %v388 = vmul.f32 %v372, %v372
      %v389 = vmul.f32 %v373, %v373
      %v390 = vmul.f32 %v374, %v374
      %v391 = vmul.f32 %v375, %v375
      %v392 = vmul.f32 %v376, %v376
      %v393 = vmul.f32 %v377, %v377
      %v394 = vmul.f32 %v378, %v378
      %v395 = vmul.f32 %v379, %v379
      %v396 = vmul.f32 %v380, %v380
      %v397 = vsel %vm319, %v381, 0.0
      %v398 = vsel %vm319, %v382, 0.0
      %v399 = vadd.f32 %v397, %v398
      %v400 = vsel %vm319, %v383, 0.0
      %v401 = vadd.f32 %v399, %v400
      %v402 = vsel %vm319, %v384, 0.0
      %v403 = vadd.f32 %v401, %v402
      %v404 = vsel %vm319, %v385, 0.0
      %v405 = vadd.f32 %v403, %v404
      %v406 = vsel %vm319, %v386, 0.0
      %v407 = vadd.f32 %v405, %v406
      %v408 = vsel %vm319, %v387, 0.0
      %v409 = vadd.f32 %v407, %v408
      %v410 = vsel %vm319, %v388, 0.0
      %v411 = vadd.f32 %v409, %v410
      %v412 = vrot.slane %v411, 4
      %v413 = vadd.f32 %v411, %v412
      %v414 = vrot.slane %v413, 2
      %v415 = vadd.f32 %v413, %v414
      %v416 = vrot.slane %v415, 1
      %v417 = vadd.f32 %v415, %v416
      %v418 = vsel %vm319, %v389, 0.0
      %v419 = vsel %vm319, %v390, 0.0
      %v420 = vadd.f32 %v418, %v419
      %v421 = vsel %vm319, %v391, 0.0
      %v422 = vadd.f32 %v420, %v421
      %v423 = vsel %vm319, %v392, 0.0
      %v424 = vadd.f32 %v422, %v423
      %v425 = vsel %vm319, %v393, 0.0
      %v426 = vadd.f32 %v424, %v425
      %v427 = vsel %vm319, %v394, 0.0
      %v428 = vadd.f32 %v426, %v427
      %v429 = vsel %vm319, %v395, 0.0
      %v430 = vadd.f32 %v428, %v429
      %v431 = vsel %vm319, %v396, 0.0
      %v432 = vadd.f32 %v430, %v431
      %v433 = vrot.slane %v432, 4
      %v434 = vadd.f32 %v432, %v433
      %v435 = vrot.slane %v434, 2
      %v436 = vadd.f32 %v434, %v435
      %v437 = vrot.slane %v436, 1
      %v438 = vadd.f32 %v436, %v437
      %v439 = vmul.f32 %v417, %v362
      %v440 = vmul.f32 %v438, %v362
      %v441 = vadd.f32 %v439, 1e-05
      %v442 = vadd.f32 %v440, 1e-05
      %v443 = vrsqrt.pop %v441
      %v444 = vmul.f32 %v441, %v443
      %vm445 = vcmp.eq.f32.partialorder %v441, inf
      %v446 = vsel %vm445, %v441, %v444
      %vm447 = vcmp.eq.f32.partialorder %v441, 0.0
      %v448 = vand.u32 %v441, 2147483648
      %v449 = vsel %vm447, %v448, %v446
      %v450 = vrsqrt.pop %v442
      %v451 = vmul.f32 %v442, %v450
      %vm452 = vcmp.eq.f32.partialorder %v442, inf
      %v453 = vsel %vm452, %v442, %v451
      %vm454 = vcmp.eq.f32.partialorder %v442, 0.0
      %v455 = vand.u32 %v442, 2147483648
      %v456 = vsel %vm454, %v455, %v453
      %vm457 = vcmask 57344
      %458 = vst.msk [vmem:[%s285] sm:$0x1] %vm457, %v363
      %459 = vst.msk [vmem:[%s285 + $0x2] sm:$0x1] %vm457, %v364
      %460 = vst.msk [vmem:[%s285 + $0x1] sm:$0x1] %vm457, %v449
      %461 = vst.msk [vmem:[%s285 + $0x3] sm:$0x1] %vm457, %v456
      %v462 = vrcp.pop %v449
      %v463 = vrcp.pop %v456
      %v464 = vld [vmem:[%s264] sm:$0x1]
      %v465 = vld [vmem:[%s267] sm:$0x1]
      %v466 = vmul.f32 %v464, %v462
      %v467 = vmul.f32 %v464, %v463
      %v468 = vmul.f32 %v363, %v466
      %v469 = vmul.f32 %v364, %v467
      %v470 = vsub.f32 %v465, %v468
      %v471 = vsub.f32 %v465, %v469
      %v474 = vlaneseq
      %v475 = vshrl.u32 %v474, 7
      %v476 = vsub.s32 0, %v475
      %v477 = vrot.slane %v466, %v476
      %v478 = vlaneseq
      %v479 = vshrl.u32 %v478, 7
      %v480 = vsub.s32 0, %v479
      %v481 = vrot.slane %v467, %v480
      %v484 = vmul.f32 %v287, %v477
      %v485 = vmul.f32 %v288, %v477
      %v486 = vmul.f32 %v289, %v477
      %v487 = vmul.f32 %v290, %v477
      %v488 = vmul.f32 %v291, %v477
      %v489 = vmul.f32 %v292, %v477
      %v490 = vmul.f32 %v293, %v477
      %v491 = vmul.f32 %v294, %v477
      %v492 = vmul.f32 %v295, %v477
      %v493 = vmul.f32 %v296, %v477
      %v494 = vmul.f32 %v297, %v477
      %v495 = vmul.f32 %v298, %v477
      %v496 = vmul.f32 %v299, %v477
      %v497 = vmul.f32 %v300, %v477
      %v498 = vmul.f32 %v301, %v477
      %v499 = vmul.f32 %v302, %v477
      %v500 = vmul.f32 %v303, %v481
      %v501 = vmul.f32 %v304, %v481
      %v502 = vmul.f32 %v305, %v481
      %v503 = vmul.f32 %v306, %v481
      %v504 = vmul.f32 %v307, %v481
      %v505 = vmul.f32 %v308, %v481
      %v506 = vmul.f32 %v309, %v481
      %v507 = vmul.f32 %v310, %v481
      %v508 = vmul.f32 %v311, %v481
      %v509 = vmul.f32 %v312, %v481
      %v510 = vmul.f32 %v313, %v481
      %v511 = vmul.f32 %v314, %v481
      %v512 = vmul.f32 %v315, %v481
      %v513 = vmul.f32 %v316, %v481
      %v514 = vmul.f32 %v317, %v481
      %v515 = vmul.f32 %v318, %v481
      %v518 = vlaneseq
      %v519 = vshrl.u32 %v518, 7
      %v520 = vsub.s32 0, %v519
      %v521 = vrot.slane %v470, %v520
      %v522 = vlaneseq
      %v523 = vshrl.u32 %v522, 7
      %v524 = vsub.s32 0, %v523
      %v525 = vrot.slane %v471, %v524
      %v528 = vadd.f32 %v484, %v521
      %v529 = vadd.f32 %v485, %v521
      %v530 = vadd.f32 %v486, %v521
      %v531 = vadd.f32 %v487, %v521
      %v532 = vadd.f32 %v488, %v521
      %v533 = vadd.f32 %v489, %v521
      %v534 = vadd.f32 %v490, %v521
      %v535 = vadd.f32 %v491, %v521
      %v536 = vadd.f32 %v492, %v521
      %v537 = vadd.f32 %v493, %v521
      %v538 = vadd.f32 %v494, %v521
      %v539 = vadd.f32 %v495, %v521
      %v540 = vadd.f32 %v496, %v521
      %v541 = vadd.f32 %v497, %v521
      %v542 = vadd.f32 %v498, %v521
      %v543 = vadd.f32 %v499, %v521
      %v544 = vadd.f32 %v500, %v525
      %v545 = vadd.f32 %v501, %v525
      %v546 = vadd.f32 %v502, %v525
      %v547 = vadd.f32 %v503, %v525
      %v548 = vadd.f32 %v504, %v525
      %v549 = vadd.f32 %v505, %v525
      %v550 = vadd.f32 %v506, %v525
      %v551 = vadd.f32 %v507, %v525
      %v552 = vadd.f32 %v508, %v525
      %v553 = vadd.f32 %v509, %v525
      %v554 = vadd.f32 %v510, %v525
      %v555 = vadd.f32 %v511, %v525
      %v556 = vadd.f32 %v512, %v525
      %v557 = vadd.f32 %v513, %v525
      %v558 = vadd.f32 %v514, %v525
      %v559 = vadd.f32 %v515, %v525
      %560 = vst.msk [vmem:[%s276] sm:$0xff] %vm319, %v528
      %561 = vst.msk [vmem:[%s276 + $0x8] sm:$0xff] %vm319, %v529
      %562 = vst.msk [vmem:[%s276 + $0x10] sm:$0xff] %vm319, %v530
      %563 = vst.msk [vmem:[%s276 + $0x18] sm:$0xff] %vm319, %v531
      %564 = vst.msk [vmem:[%s276 + $0x20] sm:$0xff] %vm319, %v532
      %565 = vst.msk [vmem:[%s276 + $0x28] sm:$0xff] %vm319, %v533
      %566 = vst.msk [vmem:[%s276 + $0x30] sm:$0xff] %vm319, %v534
      %567 = vst.msk [vmem:[%s276 + $0x38] sm:$0xff] %vm319, %v535
      %568 = vst.msk [vmem:[%s276 + $0x40] sm:$0xff] %vm319, %v536
      %569 = vst.msk [vmem:[%s276 + $0x48] sm:$0xff] %vm319, %v537
      %570 = vst.msk [vmem:[%s276 + $0x50] sm:$0xff] %vm319, %v538
      %571 = vst.msk [vmem:[%s276 + $0x58] sm:$0xff] %vm319, %v539
      %572 = vst.msk [vmem:[%s276 + $0x60] sm:$0xff] %vm319, %v540
      %573 = vst.msk [vmem:[%s276 + $0x68] sm:$0xff] %vm319, %v541
      %574 = vst.msk [vmem:[%s276 + $0x70] sm:$0xff] %vm319, %v542
      %575 = vst.msk [vmem:[%s276 + $0x78] sm:$0xff] %vm319, %v543
      %576 = vst.msk [vmem:[%s276 + $0x80] sm:$0xff] %vm319, %v544
      %577 = vst.msk [vmem:[%s276 + $0x88] sm:$0xff] %vm319, %v545
      %578 = vst.msk [vmem:[%s276 + $0x90] sm:$0xff] %vm319, %v546
      %579 = vst.msk [vmem:[%s276 + $0x98] sm:$0xff] %vm319, %v547
      %580 = vst.msk [vmem:[%s276 + $0xa0] sm:$0xff] %vm319, %v548
      %581 = vst.msk [vmem:[%s276 + $0xa8] sm:$0xff] %vm319, %v549
      %582 = vst.msk [vmem:[%s276 + $0xb0] sm:$0xff] %vm319, %v550
      %583 = vst.msk [vmem:[%s276 + $0xb8] sm:$0xff] %vm319, %v551
      %584 = vst.msk [vmem:[%s276 + $0xc0] sm:$0xff] %vm319, %v552
      %585 = vst.msk [vmem:[%s276 + $0xc8] sm:$0xff] %vm319, %v553
      %586 = vst.msk [vmem:[%s276 + $0xd0] sm:$0xff] %vm319, %v554
      %587 = vst.msk [vmem:[%s276 + $0xd8] sm:$0xff] %vm319, %v555
      %588 = vst.msk [vmem:[%s276 + $0xe0] sm:$0xff] %vm319, %v556
      %589 = vst.msk [vmem:[%s276 + $0xe8] sm:$0xff] %vm319, %v557
      %590 = vst.msk [vmem:[%s276 + $0xf0] sm:$0xff] %vm319, %v558
      %591 = vst.msk [vmem:[%s276 + $0xf8] sm:$0xff] %vm319, %v559
      %s592 = smul.u32 2, %s20
      %p593 = scmp.lt.s32.totalorder %s592, 3
      %s594 = scalar_select %p593, %s592, 3
      %p595 = scmp.lt.s32.totalorder %s21, 0
      %s596 = scalar_select %p595, %s21, 0
      %s597 = smul.addr %s594, 16
      %s598 = sadd.s32 %s596, %s597
      %s599 = smul.addr %s598, 8
      %s600 = scalar_lea.vmem %s3, %s599
      %s601 = smul.u32 2, %s20
      %p602 = scmp.lt.s32.totalorder %s601, 3
      %s603 = scalar_select %p602, %s601, 3
      %p604 = scmp.lt.s32.totalorder %s21, 0
      %s605 = scalar_select %p604, %s21, 0
      %s606 = sadd.s32 %s605, %s603
      %s607 = smul.addr %s606, 2
      %s608 = scalar_lea.vmem %s4, %s607
      // Predicated region
      $region33: #{revin_norm.1} parent=31 // pred_check
        %p609 = pneg %p128
      $region34: #{revin_norm.1} parent=31 // pred_check_branch
        %611 = sbr.rel (%p609) target = $region36
      $region35: #{revin_norm.1} parent=31 // pred_region
        %s612 = smul.u32 2, %s20
      $region36: #{revin_norm.1} parent=31 // pred_fallthru
        _
      // Predicated region
      $region37: #{revin_norm.1} parent=31 // pred_check
        %p613 = pneg %p156
      $region38: #{revin_norm.1} parent=31 // pred_check_branch
        %615 = sbr.rel (%p613) target = $region40
      $region39: #{revin_norm.1} parent=31 // pred_region
        %s616 = smul.u32 2, %s20
      $region40: #{revin_norm.1} parent=31 // pred_fallthru
        _
    $region32: #{revin_norm.1} parent=5 // pred_fallthru
      _
    %p617 = scmp.le.s32.totalorder 2, %s11
    // Predicated region
    $region41: #{revin_norm.1} parent=5 // pred_check
      %p618 = pneg %p617
    $region42: #{revin_norm.1} parent=5 // pred_check_branch
      %620 = sbr.rel (%p618) target = $region44
    $region43: #{revin_norm.1} parent=5 // pred_region
      %s621 = ssub.s32 %s11, 2
      // Predicated region
      $region45: #{revin_norm.1} parent=43 // pred_check
        %p622 = pneg %p134
      $region46: #{revin_norm.1} parent=43 // pred_check_branch
        %624 = sbr.rel (%p622) target = $region48
      $region47: #{revin_norm.1} parent=43 // pred_region
        %s625 = smul.u32 2, %s22
        %p626 = scmp.lt.s32.totalorder %s625, 3
        %s627 = scalar_select %p626, %s625, 3
        %p628 = scmp.lt.s32.totalorder %s23, 0
        %s629 = scalar_select %p628, %s23, 0
        %s630 = smul.addr %s627, 16
        %s631 = sadd.s32 %s629, %s630
        %s632 = smul.addr %s631, 8
        %s633 = scalar_lea.vmem %s3, %s632
      $region48: #{revin_norm.1} parent=43 // pred_fallthru
        _
      // Predicated region
      $region49: #{revin_norm.1} parent=43 // pred_check
        %p634 = pneg %p162
      $region50: #{revin_norm.1} parent=43 // pred_check_branch
        %636 = sbr.rel (%p634) target = $region52
      $region51: #{revin_norm.1} parent=43 // pred_region
        %s637 = smul.u32 2, %s22
        %p638 = scmp.lt.s32.totalorder %s637, 3
        %s639 = scalar_select %p638, %s637, 3
        %p640 = scmp.lt.s32.totalorder %s23, 0
        %s641 = scalar_select %p640, %s23, 0
        %s642 = sadd.s32 %s641, %s639
        %s643 = smul.addr %s642, 2
        %s644 = scalar_lea.vmem %s4, %s643
      $region52: #{revin_norm.1} parent=43 // pred_fallthru
        _
    $region44: #{revin_norm.1} parent=5 // pred_fallthru
      _
  $region6: #{revin_norm.1} parent=0 // loop_footer
    %s15 = sadd.s32 1, %s11
  $region7: #{revin_norm.1} parent=0 // loop_footer_branch
    %10 = sbr.rel target = $region3
  $region8: #{revin_norm.1} parent=0 // loop_exit
    _

</llo_original>
